<compile_context>
chip_gen: v5e
topology: v5e:2x2
jax: 0.10.0
libtpu: 0.0.40
codegen_flags: <defaults>
</compile_context>

<pallas_src>
import jax
import jax.numpy as jnp
from jax import lax
from jax.experimental import pallas as pl
from jax.experimental.pallas import tpu as pltpu


def _attn_score_softmax_kernel(q_ref, enc_ref, bias_ref, out_ref):
    """Fused attention scores + softmax for one batch element.

    q_ref    : (1, H)  query row, enc-native dtype ('general' already W-projected)
    enc_ref  : (T, H)  encoder outputs for this batch element, native dtype
    bias_ref : (1, 1)  per-batch scalar energy offset (h . bias for 'general', 0 for 'dot')
    out_ref  : (1, T)  softmax attention weights (f32)
    """
    q = q_ref[...]                                   # (1, H)
    enc = enc_ref[...]                               # (T, H)
    # Contract H on the MXU: (1, H) x (T, H)^T -> (1, T), f32 accumulation.
    energies = lax.dot_general(
        q, enc,
        dimension_numbers=(((1,), (1,)), ((), ())),
        preferred_element_type=jnp.float32)
    # Per-row constant (softmax-invariant) but kept for parity with the reference energies.
    energies = energies + bias_ref[...].astype(jnp.float32)
    # Numerically-stable softmax over T (max/sum on XLU, exp on EUP).
    m = jnp.max(energies, axis=-1, keepdims=True)
    p = jnp.exp(energies - m)
    out_ref[...] = (p / jnp.sum(p, axis=-1, keepdims=True)).astype(out_ref.dtype)


def attn_forward_pallas(h, encoder_outputs, method="dot", attn_w=None, attn_b=None):
    """Pallas forward of the Attn module.

    h               : (B, H)     decoder hidden (== hidden[0][0] in the PyTorch code)
    encoder_outputs : (B, T, H)  batch-first encoder outputs, any float dtype
    returns         : (B, 1, T)  f32 softmax attention weights (matches .unsqueeze(1))
    """
    B, T, H = encoder_outputs.shape
    enc_dtype = encoder_outputs.dtype

    if method == "dot":
        q = h
        bias = jnp.zeros((B,), jnp.float32)
    elif method == "general":
        # Exact identity for nn.Linear weight layout (out, in):
        #   h . (W e + b) = (h @ W) . e + (h . b)
        # Apply the Linear ONCE to the query in plain XLA (fuses with the surrounding
        # graph); the kernel never touches W / b and enc stays in its native dtype.
        hf = h.astype(jnp.float32)
        q = jnp.dot(hf, attn_w.astype(jnp.float32),
                    preferred_element_type=jnp.float32)        # (B, H) == W^T h
        bias = jnp.dot(hf, attn_b.astype(jnp.float32))          # (B,)   == h . bias
    else:
        # TODO(synk): 'concat' scoring is ill-defined in the reference
        # (torch.cat((hidden, encoder_output), 1) on 1-D tensors raises); not translated.
        raise NotImplementedError(f"Attn method {method!r} not supported")

    # Query in enc's native dtype so the MXU sees matched operands (bf16 or f32);
    # tiny (B,H) cast, fuses in XLA.  Bias is a per-batch f32 scalar.
    q = q.astype(enc_dtype)[:, None, :]            # (B, 1, H)
    bias = bias.astype(jnp.float32)[:, None, None]  # (B, 1, 1)

    # Only raise the scoped VMEM limit if the per-step enc slab ever outgrows the
    # conservative default; cap at a v7x-safe budget.
    enc_block_bytes = T * H * jnp.dtype(enc_dtype).itemsize
    needed_vmem = 2 * enc_block_bytes + (2 << 20)   # double-buffered enc + small blocks
    params = {"dimension_semantics": ("parallel",)}
    if needed_vmem > 16 * 1024 * 1024:
        params["vmem_limit_bytes"] = int(min(needed_vmem, 32 * 1024 * 1024))

    weights = pl.pallas_call(
        _attn_score_softmax_kernel,
        out_shape=jax.ShapeDtypeStruct((B, 1, T), jnp.float32),
        grid=(B,),
        in_specs=[
            pl.BlockSpec((None, 1, H), lambda b: (b, 0, 0)),   # q     -> (1, H)
            pl.BlockSpec((None, T, H), lambda b: (b, 0, 0)),   # enc   -> (T, H)
            pl.BlockSpec((None, 1, 1), lambda b: (b, 0, 0)),   # bias  -> (1, 1)
        ],
        out_specs=pl.BlockSpec((None, 1, T), lambda b: (b, 0, 0)),  # out -> (1, T)
        compiler_params=pltpu.CompilerParams(**params),
    )(q, encoder_outputs, bias)

    return weights                                   # (B, 1, T)


class AttnPallas:
    """Mirror of the PyTorch Attn module."""

    def __init__(self, method, hidden_size, key=None):
        self.method = method
        self.hidden_size = hidden_size
        self.attn_w = None
        self.attn_b = None
        if key is None:
            key = jax.random.PRNGKey(0)
        if method == "general":
            # nn.Linear(hidden, hidden) init: U(-1/sqrt(in), 1/sqrt(in)).
            # Kept f32: the Linear is hoisted into the XLA graph, never DMA'd to the kernel.
            k = 1.0 / jnp.sqrt(jnp.float32(hidden_size))
            k1, k2 = jax.random.split(key)
            self.attn_w = jax.random.uniform(
                k1, (hidden_size, hidden_size), jnp.float32, -k, k)
            self.attn_b = jax.random.uniform(
                k2, (hidden_size,), jnp.float32, -k, k)
        elif method == "concat":
            # TODO(synk): 'concat' method omitted (reference implementation is buggy).
            raise NotImplementedError("concat method not supported")

    def forward(self, hidden, encoder_outputs):
        # hidden is an LSTM-style state tuple (h, c), h of shape (1, B, H);
        # hidden[0][0][b] in the PyTorch code == h[0, b] here.
        h = hidden[0][0]                               # (B, H)
        return attn_forward_pallas(h, encoder_outputs, self.method,
                                   self.attn_w, self.attn_b)


def _attn_reference(h, encoder_outputs, method, attn_w=None, attn_b=None):
    """Pure-JAX reference (literal translation of the PyTorch scoring)."""
    if method == "dot":
        e = jnp.einsum("bh,bth->bt", h, encoder_outputs)
    elif method == "general":
        proj = jnp.einsum("bth,kh->btk", encoder_outputs, attn_w) + attn_b
        e = jnp.einsum("bh,bth->bt", h, proj)
    else:
        raise NotImplementedError(method)
    sm = jax.nn.softmax(e, axis=1)       # nn.Softmax() on a 2-D input -> dim=1
    return sm[:, None, :]


if __name__ == "__main__":
    hidden_size = 256        # matches the module's global hidden_size
    batch, max_len = 2, 8

    key = jax.random.PRNGKey(0)
    k_enc, k_h, k_mod = jax.random.split(key, 3)

    encoder_outputs = jax.random.normal(
        k_enc, (batch, max_len, hidden_size), jnp.float32)
    h0 = jax.random.normal(k_h, (1, batch, hidden_size), jnp.float32)
    c0 = jnp.zeros((1, batch, hidden_size), jnp.float32)
    hidden = (h0, c0)        # (h, c) tuple, as hidden[0][0][b] indexing implies

    # --- method = 'dot' (f32 inputs) ---
    attn_dot = AttnPallas("dot", hidden_size)
    out_dot = jax.block_until_ready(attn_dot.forward(hidden, encoder_outputs))
    ref_dot = _attn_reference(h0[0], encoder_outputs, "dot")
    assert out_dot.shape == (batch, 1, max_len)
    assert jnp.allclose(out_dot, ref_dot, atol=1e-4, rtol=1e-4)
    assert jnp.allclose(jnp.sum(out_dot, axis=-1), 1.0, atol=1e-5)

    # --- method = 'general' (f32 inputs) ---
    attn_gen = AttnPallas("general", hidden_size, key=k_mod)
    out_gen = jax.block_until_ready(attn_gen.forward(hidden, encoder_outputs))
    ref_gen = _attn_reference(h0[0], encoder_outputs, "general",
                              attn_gen.attn_w, attn_gen.attn_b)
    assert out_gen.shape == (batch, 1, max_len)
    assert jnp.allclose(out_gen, ref_gen, atol=1e-4, rtol=1e-4)
    assert jnp.allclose(jnp.sum(out_gen, axis=-1), 1.0, atol=1e-5)

    # --- method = 'dot' with native bf16 encoder outputs (no wrapper upcast) ---
    enc_bf16 = encoder_outputs.astype(jnp.bfloat16)
    out_bf16 = jax.block_until_ready(
        attn_forward_pallas(h0[0], enc_bf16, "dot"))
    ref_bf16 = _attn_reference(
        h0[0].astype(jnp.bfloat16).astype(jnp.float32),
        enc_bf16.astype(jnp.float32), "dot")
    assert out_bf16.shape == (batch, 1, max_len)
    assert jnp.allclose(out_bf16, ref_bf16, atol=1e-3, rtol=1e-3)
    assert jnp.allclose(jnp.sum(out_bf16, axis=-1), 1.0, atol=1e-3)

    print("KERNEL_OK")
</pallas_src>

<mosaic_0001>
module attributes {stable_mosaic.version = 11 : i64} {
  func.func @_attn_score_softmax_kernel(%arg0: i32, %arg1: memref<1x1x256xf32, #tpu.memory_space<vmem>>, %arg2: memref<1x8x256xf32, #tpu.memory_space<vmem>>, %arg3: memref<1x1x1xf32, #tpu.memory_space<vmem>>, %arg4: memref<1x1x8xf32, #tpu.memory_space<vmem>>) attributes {dimension_semantics = [#tpu.dimension_semantics<parallel>], iteration_bounds = array<i64: 2>, scalar_prefetch = 0 : i64, scratch_operands = 0 : i64, tpu.core_type = #tpu.core_type<tc>, window_params = [{transform_indices = @transform_0, window_bounds = array<i64: 1, 1, 256>}, {transform_indices = @transform_1, window_bounds = array<i64: 1, 8, 256>}, {transform_indices = @transform_2, window_bounds = array<i64: 1, 1, 1>}, {transform_indices = @transform_3, window_bounds = array<i64: 1, 1, 8>}]} {
    %c0 = arith.constant 0 : index
    %c0_0 = arith.constant 0 : index
    %c0_1 = arith.constant 0 : index
    %0 = vector.load %arg1[%c0, %c0_0, %c0_1] : memref<1x1x256xf32, #tpu.memory_space<vmem>>, vector<1x1x256xf32>
    %1 = vector.shape_cast %0 : vector<1x1x256xf32> to vector<1x256xf32>
    %c0_2 = arith.constant 0 : index
    %c0_3 = arith.constant 0 : index
    %c0_4 = arith.constant 0 : index
    %2 = vector.load %arg2[%c0_2, %c0_3, %c0_4] : memref<1x8x256xf32, #tpu.memory_space<vmem>>, vector<1x8x256xf32>
    %3 = vector.shape_cast %2 : vector<1x8x256xf32> to vector<8x256xf32>
    %cst = arith.constant dense<0.000000e+00> : vector<1x8xf32>
    %4 = tpu.matmul %1, %3, %cst {dimension_numbers = #tpu.dot_dimension_numbers<[1], [1], [0], [0], [0, 0, 1, 0], [], []>} : vector<1x256xf32>, vector<8x256xf32>, vector<1x8xf32> -> vector<1x8xf32>
    %c0_5 = arith.constant 0 : index
    %c0_6 = arith.constant 0 : index
    %c0_7 = arith.constant 0 : index
    %5 = vector.load %arg3[%c0_5, %c0_6, %c0_7] : memref<1x1x1xf32, #tpu.memory_space<vmem>>, vector<1x1x1xf32>
    %6 = vector.shape_cast %5 : vector<1x1x1xf32> to vector<1x1xf32>
    %7 = vector.broadcast %6 : vector<1x1xf32> to vector<1x8xf32>
    %8 = arith.addf %4, %7 : vector<1x8xf32>
    %cst_8 = arith.constant dense<0xFF800000> : vector<1xf32>
    %9 = vector.multi_reduction <maximumf>, %8, %cst_8 [1] : vector<1x8xf32> to vector<1xf32>
    %10 = vector.shape_cast %9 : vector<1xf32> to vector<1x1xf32>
    %11 = vector.broadcast %10 : vector<1x1xf32> to vector<1x8xf32>
    %12 = arith.subf %8, %11 : vector<1x8xf32>
    %13 = math.exp %12 : vector<1x8xf32>
    %cst_9 = arith.constant dense<0.000000e+00> : vector<1xf32>
    %14 = vector.multi_reduction <add>, %13, %cst_9 [1] : vector<1x8xf32> to vector<1xf32>
    %15 = vector.shape_cast %14 : vector<1xf32> to vector<1x1xf32>
    %16 = vector.broadcast %15 : vector<1x1xf32> to vector<1x8xf32>
    %17 = arith.divf %13, %16 : vector<1x8xf32>
    %c0_10 = arith.constant 0 : index
    %c0_11 = arith.constant 0 : index
    %c0_12 = arith.constant 0 : index
    %18 = vector.load %arg4[%c0_10, %c0_11, %c0_12] : memref<1x1x8xf32, #tpu.memory_space<vmem>>, vector<1x1x8xf32>
    %19 = vector.shape_cast %18 : vector<1x1x8xf32> to vector<1x8xf32>
    %20 = vector.shape_cast %17 : vector<1x8xf32> to vector<1x1x8xf32>
    tpu.vector_store %arg4[%c0_10, %c0_11, %c0_12], %20 {strides = array<i32>} : memref<1x1x8xf32, #tpu.memory_space<vmem>>, vector<1x1x8xf32>,
    return
  }
  func.func @transform_0(%arg0: i32) -> (i32, i32, i32) {
    %c0_i32 = arith.constant 0 : i32
    %c0_i32_0 = arith.constant 0 : i32
    %c0_i32_1 = arith.constant 0 : i32
    return %arg0, %c0_i32, %c0_i32_0 : i32, i32, i32
  }
  func.func @transform_1(%arg0: i32) -> (i32, i32, i32) {
    %c0_i32 = arith.constant 0 : i32
    %c0_i32_0 = arith.constant 0 : i32
    %c0_i32_1 = arith.constant 0 : i32
    return %arg0, %c0_i32, %c0_i32_0 : i32, i32, i32
  }
  func.func @transform_2(%arg0: i32) -> (i32, i32, i32) {
    %c0_i32 = arith.constant 0 : i32
    %c0_i32_0 = arith.constant 0 : i32
    %c0_i32_1 = arith.constant 0 : i32
    return %arg0, %c0_i32, %c0_i32_0 : i32, i32, i32
  }
  func.func @transform_3(%arg0: i32) -> (i32, i32, i32) {
    %c0_i32 = arith.constant 0 : i32
    %c0_i32_0 = arith.constant 0 : i32
    %c0_i32_1 = arith.constant 0 : i32
    return %arg0, %c0_i32, %c0_i32_0 : i32, i32, i32
  }
}

</mosaic_0001>

<llo_original>
// kernel: tpu_custom_call.1
$region0: #{tpu_custom_call.1}
  #allocation0 [shape = 'u32[]', space=smem, size = 0x4, offset = 0x4, fixed_abs, tag = 'smem constant byte address 0x4 - core index']
  #allocation1 [shape = 'u32[72,128]{1,0:T(1,128)}', space=vmem, size = 0x9000, scoped, tag = 'internal scratch']
  %s0 = inlined_call_operand.hbm [shape: f32[2,1,256], index: 0, kind: input, shape index: {}]
  %s1 = inlined_call_operand.hbm [shape: f32[2,8,256], index: 1, kind: input, shape index: {}]
  %s2 = inlined_call_operand.vmem [shape: f32[2,1,1], index: 2, kind: input, shape index: {}]
  %s3 = inlined_call_operand.hbm [shape: f32[2,1,8], index: 3, kind: output, shape index: {}]
  %s4 = sld [smem:[#allocation0]]
  $region53: #{tpu_custom_call.1} parent=0
    _
  %s6 = ssub.s32 1, %s4
  %s7 = scalar_select 0, %s6, %s4
  $region1: #{tpu_custom_call.1} parent=0
    #allocation2 [shape = 'u8[2048]{0}', space=vmem, size = 0x800, scoped, tag = 'input window, operand 0']
    #allocation3 [shape = 's32[2]{0}', space=sflag, size = 0x8, scoped, tag = 'scoped memory for tpu_custom_call.1']
    #allocation4 [shape = 's32[2]{0}', space=sflag, size = 0x8, scoped, tag = 'scoped memory for tpu_custom_call.1']
    #allocation5 [shape = 'u8[16384]{0}', space=vmem, size = 0x4000, scoped, tag = 'input window, operand 1']
    #allocation6 [shape = 's32[2]{0}', space=sflag, size = 0x8, scoped, tag = 'scoped memory for tpu_custom_call.1']
    #allocation7 [shape = 'u8[1024]{0}', space=vmem, size = 0x400, scoped, tag = 'output window, operand 0']
    %8 = vsyncpa [#allocation3], 0
    %s9 = scalar_lea.sflag [#allocation3], 1
    %10 = vsyncpa %s9, 0
    %11 = vsyncpa [#allocation6], 0
    %s12 = scalar_lea.sflag [#allocation6], 1
    %13 = vsyncpa %s12, 0
    %14 = vsyncpa [#allocation4], 0
    %s15 = scalar_lea.sflag [#allocation4], 1
    %16 = vsyncpa %s15, 0
    loop: start=0, step=1, limit=4
    $region2: #{tpu_custom_call.1} parent=1 // loop_pre_header
      _
    $region3: #{tpu_custom_call.1} parent=1 // loop_header
      %s18 = sphi 0, %s22
      %p19 = scmp.ge.s32.totalorder %s18, 4
      %s28 = sphi 0, %s30
      %s31 = sphi 0, %s28
      %s32 = sphi 0, %s31
      %s48 = sphi 0, %s32
      %s54 = sphi 0, %s56
      %s57 = sphi 0, %s54
      %s58 = sphi 0, %s57
      %s74 = sphi 0, %s58
      %s80 = sphi 0, %s82
      %s83 = sphi 0, %s80
      %s84 = sphi 0, %s83
      %s100 = sphi 0, %s84
      %s106 = sphi 0, %s108
      %s109 = sphi 0, %s106
      %s110 = sphi 0, %s109
      %s126 = sphi 0, %s110
    $region4: #{tpu_custom_call.1} parent=1 // loop_header_branch
      %21 = sbr.rel (%p19) target = $region8
    $region5: #{tpu_custom_call.1} parent=1 // loop_body
      %s23 = ssub.s32 %s18, 1
      %s24 = ssub.s32 %s18, 2
      %s25 = sadd.s32 %s18, 1
      %s26 = ssub.s32 %s18, %s25
      %p27 = scmp.eq.s32.totalorder %s26, 0
      %s29 = sadd.s32 %s28, 1
      %s30 = scalar_select %p27, %s28, %s29
      %p33 = pneg %p27
      %p34 = scmp.eq.s32.totalorder %s18, 1
      %p35 = por %p33, %p34
      %p36 = scmp.ne.s32.totalorder %s28, %s31
      %p37 = scmp.eq.s32.totalorder %s18, 0
      %p38 = por %p36, %p37
      %p39 = scmp.ne.s32.totalorder %s28, %s31
      %p40 = scmp.eq.s32.totalorder %s23, 1
      %p41 = por %p39, %p40
      %p42 = scmp.ne.s32.totalorder %s31, %s32
      %p43 = scmp.eq.s32.totalorder %s23, 0
      %p44 = por %p42, %p43
      %p45 = scmp.ne.s32.totalorder %s31, %s32
      %p46 = scmp.eq.s32.totalorder %s24, 1
      %p47 = por %p45, %p46
      %p49 = scmp.ne.s32.totalorder %s32, %s48
      %p50 = scmp.eq.s32.totalorder %s24, 0
      %p51 = por %p49, %p50
      %s52 = ssub.s32 %s18, %s25
      %p53 = scmp.eq.s32.totalorder %s52, 0
      %s55 = sadd.s32 %s54, 1
      %s56 = scalar_select %p53, %s54, %s55
      %p59 = pneg %p53
      %p60 = scmp.eq.s32.totalorder %s18, 1
      %p61 = por %p59, %p60
      %p62 = scmp.ne.s32.totalorder %s54, %s57
      %p63 = scmp.eq.s32.totalorder %s18, 0
      %p64 = por %p62, %p63
      %p65 = scmp.ne.s32.totalorder %s54, %s57
      %p66 = scmp.eq.s32.totalorder %s23, 1
      %p67 = por %p65, %p66
      %p68 = scmp.ne.s32.totalorder %s57, %s58
      %p69 = scmp.eq.s32.totalorder %s23, 0
      %p70 = por %p68, %p69
      %p71 = scmp.ne.s32.totalorder %s57, %s58
      %p72 = scmp.eq.s32.totalorder %s24, 1
      %p73 = por %p71, %p72
      %p75 = scmp.ne.s32.totalorder %s58, %s74
      %p76 = scmp.eq.s32.totalorder %s24, 0
      %p77 = por %p75, %p76
      %s78 = ssub.s32 %s18, %s25
      %p79 = scmp.eq.s32.totalorder %s78, 0
      %s81 = sadd.s32 %s80, 1
      %s82 = scalar_select %p79, %s80, %s81
      %p85 = pneg %p79
      %p86 = scmp.eq.s32.totalorder %s18, 1
      %p87 = por %p85, %p86
      %p88 = scmp.ne.s32.totalorder %s80, %s83
      %p89 = scmp.eq.s32.totalorder %s18, 0
      %p90 = por %p88, %p89
      %p91 = scmp.ne.s32.totalorder %s80, %s83
      %p92 = scmp.eq.s32.totalorder %s23, 1
      %p93 = por %p91, %p92
      %p94 = scmp.ne.s32.totalorder %s83, %s84
      %p95 = scmp.eq.s32.totalorder %s23, 0
      %p96 = por %p94, %p95
      %p97 = scmp.ne.s32.totalorder %s83, %s84
      %p98 = scmp.eq.s32.totalorder %s24, 1
      %p99 = por %p97, %p98
      %p101 = scmp.ne.s32.totalorder %s84, %s100
      %p102 = scmp.eq.s32.totalorder %s24, 0
      %p103 = por %p101, %p102
      %s104 = ssub.s32 %s18, %s25
      %p105 = scmp.eq.s32.totalorder %s104, 0
      %s107 = sadd.s32 %s106, 1
      %s108 = scalar_select %p105, %s106, %s107
      %p111 = pneg %p105
      %p112 = scmp.eq.s32.totalorder %s18, 1
      %p113 = por %p111, %p112
      %p114 = scmp.ne.s32.totalorder %s106, %s109
      %p115 = scmp.eq.s32.totalorder %s18, 0
      %p116 = por %p114, %p115
      %p117 = scmp.ne.s32.totalorder %s106, %s109
      %p118 = scmp.eq.s32.totalorder %s23, 1
      %p119 = por %p117, %p118
      %p120 = scmp.ne.s32.totalorder %s109, %s110
      %p121 = scmp.eq.s32.totalorder %s23, 0
      %p122 = por %p120, %p121
      %p123 = scmp.ne.s32.totalorder %s109, %s110
      %p124 = scmp.eq.s32.totalorder %s24, 1
      %p125 = por %p123, %p124
      %p127 = scmp.ne.s32.totalorder %s110, %s126
      %p128 = scmp.eq.s32.totalorder %s24, 0
      %p129 = por %p127, %p128
      %p130 = scmp.le.s32.totalorder 1, %s18
      %p131 = scmp.lt.s32.totalorder %s18, 3
      %p132 = pnand %p130, %p131
      %p133 = pneg %p132
      // Predicated region
      $region9: #{tpu_custom_call.1} parent=5 // pred_check
        _
      $region10: #{tpu_custom_call.1} parent=5 // pred_check_branch
        %135 = sbr.rel (%p132) target = $region12
      $region11: #{tpu_custom_call.1} parent=5 // pred_region
        %s136 = ssub.s32 %s18, 1
      $region12: #{tpu_custom_call.1} parent=5 // pred_fallthru
        _
      %p137 = scmp.lt.s32.totalorder %s18, 2
      // Predicated region
      $region13: #{tpu_custom_call.1} parent=5 // pred_check
        %p138 = pneg %p137
      $region14: #{tpu_custom_call.1} parent=5 // pred_check_branch
        %140 = sbr.rel (%p138) target = $region16
      $region15: #{tpu_custom_call.1} parent=5 // pred_region
        // Predicated region
        $region17: #{tpu_custom_call.1} parent=15 // pred_check
          %p141 = pneg %p38
        $region18: #{tpu_custom_call.1} parent=15 // pred_check_branch
          %143 = sbr.rel (%p141) target = $region20
        $region19: #{tpu_custom_call.1} parent=15 // pred_region
          %s144 = sand.u32 %s28, 1
          %s145 = scalar_lea.sflag [#allocation3], %s144
          %s146 = sand.u32 %s28, 1
          %s147 = smul.addr %s146, 2
          %s148 = scalar_lea.vmem [#allocation2], %s147
          %150 = vsyncadd %s145, 0
          %s151 = smul.addr %s18, 2
          %s152 = scalar_lea.hbm %s0, %s151
          %s154 = sshll.u32 %s152, 4
          %s155 = int_to_ptr.hbm [resolvable:$true] %s154
          %s156 = sshll.u32 %s148, 4
          %s157 = int_to_ptr.vmem [resolvable:$true] %s156
          %159 = dma.hbm_to_vmem [thread:$0]  %s155, 32, %s157, %s145
        $region20: #{tpu_custom_call.1} parent=15 // pred_fallthru
          _
        // Predicated region
        $region21: #{tpu_custom_call.1} parent=15 // pred_check
          %p160 = pneg %p64
        $region22: #{tpu_custom_call.1} parent=15 // pred_check_branch
          %162 = sbr.rel (%p160) target = $region24
        $region23: #{tpu_custom_call.1} parent=15 // pred_region
          %s163 = sand.u32 %s54, 1
          %s164 = scalar_lea.sflag [#allocation6], %s163
          %s165 = sand.u32 %s54, 1
          %s166 = smul.addr %s165, 16
          %s167 = scalar_lea.vmem [#allocation5], %s166
          %169 = vsyncadd %s164, 0
          %s170 = smul.addr %s18, 2
          %s171 = smul.addr %s170, 8
          %s172 = scalar_lea.hbm %s1, %s171
          %s174 = sshll.u32 %s172, 4
          %s175 = int_to_ptr.hbm [resolvable:$true] %s174
          %s176 = sshll.u32 %s167, 4
          %s177 = int_to_ptr.vmem [resolvable:$true] %s176
          %179 = dma.hbm_to_vmem [thread:$0]  %s175, 256, %s177, %s164
        $region24: #{tpu_custom_call.1} parent=15 // pred_fallthru
          _
        // Predicated region
        $region25: #{tpu_custom_call.1} parent=15 // pred_check
          %p180 = pneg %p90
        $region26: #{tpu_custom_call.1} parent=15 // pred_check_branch
          %182 = sbr.rel (%p180) target = $region28
        $region27: #{tpu_custom_call.1} parent=15 // pred_region
          %p183 = scmp.lt.s32.totalorder %s18, 1
          %s184 = scalar_select %p183, %s18, 1
          %s185 = scalar_lea.vmem %s2, %s184
        $region28: #{tpu_custom_call.1} parent=15 // pred_fallthru
          _
      $region16: #{tpu_custom_call.1} parent=5 // pred_fallthru
        _
      %p186 = scmp.le.s32.totalorder 1, %s18
      %p187 = scmp.lt.s32.totalorder %s18, 3
      %p188 = pnand %p186, %p187
      %p189 = pneg %p188
      // Predicated region
      $region29: #{tpu_custom_call.1} parent=5 // pred_check
        _
      $region30: #{tpu_custom_call.1} parent=5 // pred_check_branch
        %191 = sbr.rel (%p188) target = $region32
      $region31: #{tpu_custom_call.1} parent=5 // pred_region
        %s192 = ssub.s32 %s18, 1
        %s193 = sand.u32 %s31, 1
        %s194 = scalar_lea.sflag [#allocation3], %s193
        %s195 = sand.u32 %s31, 1
        %s196 = smul.addr %s195, 2
        %s197 = scalar_lea.vmem [#allocation2], %s196
        // Predicated region
        $region33: #{tpu_custom_call.1} parent=31 // pred_check
          %p198 = pneg %p44
        $region34: #{tpu_custom_call.1} parent=31 // pred_check_branch
          %200 = sbr.rel (%p198) target = $region36
        $region35: #{tpu_custom_call.1} parent=31 // pred_region
          %202 = dma.done %s194, 32
        $region36: #{tpu_custom_call.1} parent=31 // pred_fallthru
          _
        %s203 = sand.u32 %s57, 1
        %s204 = scalar_lea.sflag [#allocation6], %s203
        %s205 = sand.u32 %s57, 1
        %s206 = smul.addr %s205, 16
        %s207 = scalar_lea.vmem [#allocation5], %s206
        // Predicated region
        $region37: #{tpu_custom_call.1} parent=31 // pred_check
          %p208 = pneg %p70
        $region38: #{tpu_custom_call.1} parent=31 // pred_check_branch
          %210 = sbr.rel (%p208) target = $region40
        $region39: #{tpu_custom_call.1} parent=31 // pred_region
          %212 = dma.done %s204, 256
        $region40: #{tpu_custom_call.1} parent=31 // pred_fallthru
          _
        %s213 = sand.u32 %s31, 1
        %s214 = scalar_lea.sflag [#allocation3], %s213
        %s215 = sand.u32 %s31, 1
        %s216 = smul.addr %s215, 2
        %s217 = scalar_lea.vmem [#allocation2], %s216
        %p218 = pneg %p44
        %p219 = pneg %p41
        %s220 = sand.u32 %s57, 1
        %s221 = scalar_lea.sflag [#allocation6], %s220
        %s222 = sand.u32 %s57, 1
        %s223 = smul.addr %s222, 16
        %s224 = scalar_lea.vmem [#allocation5], %s223
        %p225 = pneg %p70
        %p226 = pneg %p67
        %p227 = scmp.lt.s32.totalorder %s23, 1
        %s228 = scalar_select %p227, %s23, 1
        %s229 = scalar_lea.vmem %s2, %s228
        %p230 = pneg %p96
        %p231 = pneg %p93
        %p232 = pneg %p122
        %p233 = pneg %p119
        %s234 = sand.u32 %s109, 1
        %s235 = scalar_lea.sflag [#allocation4], %s234
        %s236 = sand.u32 %s109, 1
        %s237 = scalar_lea.vmem [#allocation7], %s236
        %p238 = scmp.lt.s32.totalorder %s23, 1
        %s239 = scalar_select %p238, %s23, 1
        %s240 = scalar_lea.vmem %s2, %s239
        %v241 = vld [vmem:[%s197] sm:$0x3]
        %v242 = vld [vmem:[%s207] sm:$0xff]
        %v243 = vld [vmem:[%s207 + $0x8] sm:$0xff]
        %v244 = vld [vmem:[%s240] sm:$0x1]
        %246 = vset.pattern.permute.xlu0 0
        %247 = vperm.xlu0 %246, %v244
        %v248 = vpop.permute.xlu0 %247
        %v250 = vperm.slane %v248, 0
        %v252 = vperm.slane %v241, 0
        %v253 = vperm.slane %v241, 1
        %256 = vmatpush.xpose.msra.mxu0 0.0
        %257 = vmatpush.xpose.msra.mxu0 0.0
        %258 = vmatpush.xpose.msra.mxu0 0.0
        %259 = vmatpush.xpose.msra.mxu0 0.0
        %260 = vmatpush.xpose.msra.mxu0 0.0
        %261 = vmatpush.xpose.msra.mxu0 0.0
        %262 = vmatpush.xpose.msra.mxu0 0.0
        %263 = vmatpush.xpose.msra.mxu0 0.0
        %264 = vmatpush.xpose.msra.mxu0 0.0
        %265 = vmatpush.xpose.msra.mxu0 0.0
        %266 = vmatpush.xpose.msra.mxu0 0.0
        %267 = vmatpush.xpose.msra.mxu0 0.0
        %268 = vmatpush.xpose.msra.mxu0 0.0
        %269 = vmatpush.xpose.msra.mxu0 0.0
        %270 = vmatpush.xpose.msra.mxu0 0.0
        %271 = vmatpush.xpose.msra.mxu0 %v242
        %272 = vmatmul.f32.gmra.mxu0 %v252
        %v273 = vpop.f32.mrf.mxu0
        %v274 = vadd.f32 %v250, %v273
        %275 = vdwg.mxu0
        %276 = vmatpush.xpose.msra.mxu0 0.0
        %277 = vmatpush.xpose.msra.mxu0 0.0
        %278 = vmatpush.xpose.msra.mxu0 0.0
        %279 = vmatpush.xpose.msra.mxu0 0.0
        %280 = vmatpush.xpose.msra.mxu0 0.0
        %281 = vmatpush.xpose.msra.mxu0 0.0
        %282 = vmatpush.xpose.msra.mxu0 0.0
        %283 = vmatpush.xpose.msra.mxu0 0.0
        %284 = vmatpush.xpose.msra.mxu0 0.0
        %285 = vmatpush.xpose.msra.mxu0 0.0
        %286 = vmatpush.xpose.msra.mxu0 0.0
        %287 = vmatpush.xpose.msra.mxu0 0.0
        %288 = vmatpush.xpose.msra.mxu0 0.0
        %289 = vmatpush.xpose.msra.mxu0 0.0
        %290 = vmatpush.xpose.msra.mxu0 0.0
        %291 = vmatpush.xpose.msra.mxu0 %v243
        %292 = vmatmul.f32.gmra.mxu0 %v253
        %v293 = vpop.f32.mrf.mxu0
        %v294 = vadd.f32 %v274, %v293
        %295 = vdwg.mxu0
        %vm296 = vcmask 57344
        %v297 = vsel %vm296, %v294, -inf
        %298 = vmax.xlane.f32.xlu0 %v297
        %v299 = vpop.xlane.xlu0 %298
        %v300 = vsub.f32 %v294, %v299
        %v301 = vmul.f32 %v300, 1.442695
        %v302 = vpow.pop %v301
        %v303 = vsel %vm296, %v302, 0.0
        %304 = vadd.xlane.f32.xlu0 %v303
        %v305 = vpop.xlane.xlu0 %304
        %v306 = vrcp.pop %v305
        %v307 = vmul.f32 %v305, %v306
        %v308 = vsub.f32 1.0, %v307
        %v309 = vmul.f32 %v306, %v308
        %v310 = vadd.f32 %v306, %v309
        %vm311 = vweird.f32 %v305
        %vm312 = vweird.f32 %v306
        %vm313 = vmor %vm311, %vm312
        %v314 = vsel %vm313, %v306, %v310
        %v315 = vand.u32 2147483647, %v305
        %vm316 = vcmp.eq.f32.partialorder %v315, 8.507059e+37
        %v317 = vand.u32 %v305, 2147483648
        %v318 = vor.u32 1.1754944e-38, %v317
        %v319 = vsel %vm316, %v318, %v314
        %v320 = vmul.f32 %v302, %v319
        %321 = vst.msk [vmem:[%s237] sm:$0x1] %vm296, %v320
        %s322 = sand.u32 %s109, 1
        %s323 = scalar_lea.sflag [#allocation4], %s322
        %s324 = sand.u32 %s109, 1
        %s325 = scalar_lea.vmem [#allocation7], %s324
        // Predicated region
        $region41: #{tpu_custom_call.1} parent=31 // pred_check
          %p326 = pneg %p119
        $region42: #{tpu_custom_call.1} parent=31 // pred_check_branch
          %328 = sbr.rel (%p326) target = $region44
        $region43: #{tpu_custom_call.1} parent=31 // pred_region
          %330 = vsyncadd %s323, 0
          %s331 = scalar_lea.hbm %s3, %s23
          %s333 = sshll.u32 %s325, 4
          %s334 = int_to_ptr.vmem [resolvable:$true] %s333
          %s335 = sshll.u32 %s331, 4
          %s336 = int_to_ptr.hbm [resolvable:$true] %s335
          %338 = dma.vmem_to_hbm [thread:$0]  %s334, 16, %s336, %s323
        $region44: #{tpu_custom_call.1} parent=31 // pred_fallthru
          _
      $region32: #{tpu_custom_call.1} parent=5 // pred_fallthru
        _
      %p339 = scmp.le.s32.totalorder 2, %s18
      // Predicated region
      $region45: #{tpu_custom_call.1} parent=5 // pred_check
        %p340 = pneg %p339
      $region46: #{tpu_custom_call.1} parent=5 // pred_check_branch
        %342 = sbr.rel (%p340) target = $region48
      $region47: #{tpu_custom_call.1} parent=5 // pred_region
        %s343 = ssub.s32 %s18, 2
        // Predicated region
        $region49: #{tpu_custom_call.1} parent=47 // pred_check
          %p344 = pneg %p125
        $region50: #{tpu_custom_call.1} parent=47 // pred_check_branch
          %346 = sbr.rel (%p344) target = $region52
        $region51: #{tpu_custom_call.1} parent=47 // pred_region
          %s347 = sand.u32 %s110, 1
          %s348 = scalar_lea.sflag [#allocation4], %s347
          %s349 = sand.u32 %s110, 1
          %s350 = scalar_lea.vmem [#allocation7], %s349
          %352 = dma.done %s348, 16
        $region52: #{tpu_custom_call.1} parent=47 // pred_fallthru
          _
      $region48: #{tpu_custom_call.1} parent=5 // pred_fallthru
        _
    $region6: #{tpu_custom_call.1} parent=1 // loop_footer
      %s22 = sadd.s32 1, %s18
    $region7: #{tpu_custom_call.1} parent=1 // loop_footer_branch
      %17 = sbr.rel target = $region3
    $region8: #{tpu_custom_call.1} parent=1 // loop_exit
      _
    %353 = vsyncpa [#allocation3], 1
    %s354 = scalar_lea.sflag [#allocation3], 1
    %355 = vsyncpa %s354, 1
    %356 = vsyncpa [#allocation6], 1
    %s357 = scalar_lea.sflag [#allocation6], 1
    %358 = vsyncpa %s357, 1
    %359 = vsyncpa [#allocation4], 1
    %s360 = scalar_lea.sflag [#allocation4], 1
    %361 = vsyncpa %s360, 1

</llo_original>
